<compile_context>
chip_gen: v6e
topology: v6e:2x2x1
jax: 0.10.0
libtpu: 0.0.40
codegen_flags: <defaults>
</compile_context>

<pallas_src>
import functools

import jax
import jax.numpy as jnp
from jax.experimental import pallas as pl
from jax.experimental.pallas import tpu as pltpu


def _round_up(x, n):
    return ((x + n - 1) // n) * n


def _vmem_params(est_bytes):
    """Raise the scoped-VMEM limit only when the working set needs it.

    Capped at 64 MiB so the same setting is legal on v7x (64 MiB physical VMEM)
    as well as v5e / v6e (128 MiB).
    """
    need = int(est_bytes * 1.5) + (2 << 20)
    if need <= (24 << 20):          # default scoped limit comfortably covers it
        return {}
    return {"vmem_limit_bytes": int(min(need, 64 << 20))}


# -----------------------------------------------------------------------------
# Kernel 1: fused 1x1 q/k/v projection as a tiled matmul.
# -----------------------------------------------------------------------------
def _proj_kernel(x_ref, w_ref, o_ref):
    # bf16 x bf16 -> f32 accumulation on the MXU.
    o_ref[...] = jnp.dot(x_ref[...], w_ref[...], preferred_element_type=jnp.float32)


def fused_projection(x_flat, w_t, *, tile_n=1024):
    """x_flat: [N, C] (pixels x channels), w_t: [C, O_total]  ->  [N, O_total] f32."""
    n, c = x_flat.shape
    o_tot = w_t.shape[1]
    tile_n = max(16, min(_round_up(tile_n, 16), _round_up(n, 16)))
    n_pad = _round_up(n, tile_n)

    x_bf = x_flat.astype(jnp.bfloat16)
    if n_pad != n:
        x_bf = jnp.pad(x_bf, ((0, n_pad - n), (0, 0)))
    w_bf = w_t.astype(jnp.bfloat16)

    est = 2 * tile_n * (2 * c + 4 * o_tot) + 2 * c * o_tot + (1 << 20)
    out = pl.pallas_call(
        _proj_kernel,
        out_shape=jax.ShapeDtypeStruct((n_pad, o_tot), jnp.float32),
        grid=(n_pad // tile_n,),
        in_specs=[
            pl.BlockSpec((tile_n, c), lambda i: (i, 0)),
            pl.BlockSpec((c, o_tot), lambda i: (0, 0)),      # weight stays resident
        ],
        out_specs=pl.BlockSpec((tile_n, o_tot), lambda i: (i, 0)),
        compiler_params=pltpu.CompilerParams(
            dimension_semantics=("parallel",), **_vmem_params(est)),
    )(x_bf, w_bf)
    return out[:n]


# -----------------------------------------------------------------------------
# Kernel 2: local K x K window attention with online softmax + halo DMA.
# -----------------------------------------------------------------------------
def _attn_kernel(emb_ref, q_ref, k_hbm, v_hbm, o_ref, kbuf, vbuf, sem,
                 *, TH, W, O, K, M, HALO):
    b = pl.program_id(0)
    t = pl.program_id(1)
    n_tiles = pl.num_programs(1)
    slot = t % 2

    def start_fetch(bb, tt, sl):
        r0 = tt * TH
        pltpu.make_async_copy(k_hbm.at[bb, pl.ds(r0, HALO)], kbuf.at[sl],
                              sem.at[sl, 0]).start()
        pltpu.make_async_copy(v_hbm.at[bb, pl.ds(r0, HALO)], vbuf.at[sl],
                              sem.at[sl, 1]).start()

    # Prime the pipeline at the first tile of every image.  The prefetch chain is
    # self-contained per image so the "parallel" batch axis can be split across
    # TensorCores without breaking semaphore balance.
    @pl.when(t == 0)
    def _():
        start_fetch(b, 0, 0)

    # Wait for the current tile's halo slabs.
    pltpu.make_async_copy(k_hbm.at[0, pl.ds(0, HALO)], kbuf.at[slot],
                          sem.at[slot, 0]).wait()
    pltpu.make_async_copy(v_hbm.at[0, pl.ds(0, HALO)], vbuf.at[slot],
                          sem.at[slot, 1]).wait()

    # Prefetch the next tile of the same image into the other slot.
    @pl.when(t + 1 < n_tiles)
    def _():
        start_fetch(b, t + 1, 1 - slot)

    # Hoisted emb mixing scalars (already softmaxed over m in the wrapper).
    emb = [[[emb_ref[mi * K * K + ki * K + kj] for mi in range(M)]
            for kj in range(K)] for ki in range(K)]

    q = q_ref[0]                                            # [TH, W, O]

    m_run = None
    for ki in range(K):
        for kj in range(K):
            k_win = kbuf[slot, ki:ki + TH, kj:kj + W, :]    # [TH, W, O]
            v_all = vbuf[slot, ki:ki + TH, kj:kj + W, :]    # [TH, W, M*O]
            v_mix = emb[ki][kj][0] * v_all[:, :, 0:O]
            for mi in range(1, M):
                v_mix = v_mix + emb[ki][kj][mi] * v_all[:, :, mi * O:(mi + 1) * O]
            logit = q * k_win
            if m_run is None:                               # first window: init state
                m_run = logit
                l_run = jnp.ones_like(logit)
                acc = v_mix
            else:                                           # online softmax update
                m_new = jnp.maximum(m_run, logit)
                alpha = jnp.exp(m_run - m_new)
                p = jnp.exp(logit - m_new)
                l_run = alpha * l_run + p
                acc = alpha * acc + p * v_mix
                m_run = m_new

    # TODO(synk): for very small O, flatten (W, O) onto the lane axis so the final
    # store is a fully dense vst instead of a masked partial store.
    o_ref[0] = acc * pl.reciprocal(l_run, approx=True)


def _local_attention(q, key_p, val_p, emb_flat, *, K, m, O, tile_h):
    B, H_pad, W, _ = q.shape
    Wp = key_p.shape[2]
    n_tiles = H_pad // tile_h
    halo = tile_h + K - 1
    assert key_p.shape[1] == H_pad + K - 1
    assert val_p.shape[1] == H_pad + K - 1

    est = (2 * halo * Wp * (1 + m) * O * 4      # double-buffered key/value halos
           + 2 * 2 * tile_h * W * O * 4         # pipelined q / out blocks
           + (2 << 20))

    kernel = functools.partial(_attn_kernel, TH=tile_h, W=W, O=O, K=K, M=m, HALO=halo)
    return pl.pallas_call(
        kernel,
        out_shape=jax.ShapeDtypeStruct((B, H_pad, W, O), jnp.float32),
        grid=(B, n_tiles),
        in_specs=[
            pl.BlockSpec(memory_space=pltpu.MemorySpace.SMEM),            # emb scalars
            pl.BlockSpec((1, tile_h, W, O), lambda b, t: (b, t, 0, 0)),   # q tile
            pl.BlockSpec(memory_space=pl.ANY),                            # key   (HBM)
            pl.BlockSpec(memory_space=pl.ANY),                            # value (HBM)
        ],
        out_specs=pl.BlockSpec((1, tile_h, W, O), lambda b, t: (b, t, 0, 0)),
        scratch_shapes=[
            pltpu.VMEM((2, halo, Wp, O), jnp.float32),
            pltpu.VMEM((2, halo, Wp, m * O), jnp.float32),
            pltpu.SemaphoreType.DMA((2, 2)),
        ],
        compiler_params=pltpu.CompilerParams(
            dimension_semantics=("parallel", "arbitrary"), **_vmem_params(est)),
    )(emb_flat, q, key_p, val_p)


# -----------------------------------------------------------------------------
# Wrapper reproducing AttentionStem.forward (NCHW in, NCHW out).
# -----------------------------------------------------------------------------
def _pad_for_windows(t_bhwf, pad, K, extra_h):
    """Materialize rows/cols 0 .. dim+K-2 of the zero-padded feature map.

    Reproduces PyTorch's F.pad + unfold + [:H, :W] top-left window anchoring
    exactly, including the (legal) case 2*pad > K-1 where trailing padded
    rows/cols are never referenced.  `extra_h` additionally zero-pads the bottom
    so the H-tiling halo stays in bounds (those output rows are discarded).
    """
    B, H, W, F = t_bhwf.shape
    need_h = H + K - 1
    need_w = W + K - 1
    bottom = max(0, need_h - (pad + H))
    right = max(0, need_w - (pad + W))
    out = jnp.pad(t_bhwf, ((0, 0), (pad, bottom), (pad, right), (0, 0)))
    out = out[:, :need_h, :need_w, :]
    if extra_h:
        out = jnp.pad(out, ((0, 0), (0, extra_h), (0, 0), (0, 0)))
    return out


def attention_stem_forward(x, params, *, kernel_size, stride, padding, groups, m,
                           tile_h=16, tile_n=1024):
    """AttentionStem.forward.  x: [B, C, H, W] -> [B, O, H, W].

    tile_h: output rows per attention grid step.  Keep the double-buffered
            (1 + m) * (tile_h + K - 1) * Wp * O * 4-byte halo well under half of
            VMEM (smaller tile_h on v7x, larger on v5e / v6e).
    tile_n: pixel rows per projection-matmul grid step.
    """
    B, C, H, W = x.shape
    O = params["w_query"].shape[0]
    K = kernel_size
    del groups  # emb_* are sized by O // groups but broadcast identically over channels.
    # TODO(synk): stride > 1 window extraction is not implemented (module default is 1).
    assert stride == 1, "kernel implements stride == 1"
    # PyTorch's unfold + [:H, :W] slice needs at least H (resp. W) windows:
    assert 2 * padding >= K - 1, "not enough padding for H x W output windows"

    x_nhwc = jnp.transpose(x, (0, 2, 3, 1)).astype(jnp.float32)          # [B, H, W, C]

    # ---- fused q / key / value projection on the UNPADDED input ----
    w_all = jnp.concatenate(
        [params["w_query"], params["w_key"], params["w_value"].reshape(m * O, C)],
        axis=0)                                                           # [(2+m)O, C]
    proj = fused_projection(x_nhwc.reshape(B * H * W, C), jnp.transpose(w_all),
                            tile_n=tile_n)                                # [BHW, (2+m)O]
    proj = proj.reshape(B, H, W, (2 + m) * O)
    q = proj[..., :O]                       # [B, H, W, O]
    key = proj[..., O:2 * O]                # [B, H, W, O]
    val = proj[..., 2 * O:]                 # [B, H, W, m*O]  (natural layout, no transpose;
                                            #  the kernel lane-slices the m value heads)

    # ---- spatial tiling over H ----
    th = max(1, min(tile_h, H))
    H_pad = _round_up(H, th)
    extra_h = H_pad - H

    # bias-free conv of a zero pad is zero -> pad the projection outputs instead.
    key_p = _pad_for_windows(key, padding, K, extra_h)   # [B, H_pad+K-1, W+K-1, O]
    val_p = _pad_for_windows(val, padding, K, extra_h)   # [B, H_pad+K-1, W+K-1, m*O]
    q_p = jnp.pad(q, ((0, 0), (0, extra_h), (0, 0), (0, 0))) if extra_h else q

    # ---- emb softmax over m (m * K * K scalars; SMEM input to the kernel) ----
    la = params["emb_mix"] @ params["emb_a"]                      # [m, K]
    lb = params["emb_mix"] @ params["emb_b"]                      # [m, K]
    emb = la[:, :, None] + lb[:, None, :]                         # [m, K, K]
    emb = jax.nn.softmax(emb.reshape(m, -1), axis=0).reshape(-1)  # flat [m*K*K]

    out = _local_attention(q_p, key_p, val_p, emb, K=K, m=m, O=O, tile_h=th)
    return jnp.transpose(out[:, :H], (0, 3, 1, 2))                # back to NCHW


# -----------------------------------------------------------------------------
# Pure-JAX reference mirroring the PyTorch forward (for correctness checking).
# proj_dtype lets the reference use the same bf16 MXU projection precision as
# the kernel so the comparison isolates the attention math.
# -----------------------------------------------------------------------------
def reference_forward(x, params, *, kernel_size, stride, padding, groups, m,
                      proj_dtype=jnp.float32):
    del stride, groups
    B, C, H, W = x.shape
    k = kernel_size
    xp = jnp.pad(x, ((0, 0), (0, 0), (padding, padding), (padding, padding)))

    def c1x1(inp, w):
        return jnp.einsum("bchw,oc->bohw", inp.astype(proj_dtype),
                          w.astype(proj_dtype),
                          preferred_element_type=jnp.float32)

    query = c1x1(x, params["w_query"])                                  # [B,O,H,W]
    key = c1x1(xp, params["w_key"])                                     # [B,O,Hp,Wp]
    value = jnp.stack([c1x1(xp, params["w_value"][i]) for i in range(m)], axis=0)

    key_w = jnp.stack(
        [jnp.stack([key[:, :, ki:ki + H, kj:kj + W] for kj in range(k)], axis=-1)
         for ki in range(k)], axis=-2)                                  # [B,O,H,W,k,k]
    val_w = jnp.stack(
        [jnp.stack([value[:, :, :, ki:ki + H, kj:kj + W] for kj in range(k)], axis=-1)
         for ki in range(k)], axis=-2)                                  # [m,B,O,H,W,k,k]

    la = params["emb_mix"] @ params["emb_a"]
    lb = params["emb_mix"] @ params["emb_b"]
    emb = jax.nn.softmax((la[:, :, None] + lb[:, None, :]).reshape(m, -1), axis=0)
    emb = emb.reshape(m, 1, 1, 1, 1, k, k)

    val_s = (emb * val_w).sum(0).reshape(B, -1, H, W, k * k)
    key_f = key_w.reshape(B, -1, H, W, k * k)
    att = jax.nn.softmax(query[..., None] * key_f, axis=-1)
    return (att * val_s).sum(-1)                                        # [B,O,H,W]


if __name__ == "__main__":
    B, C, O, H, W = 2, 4, 8, 16, 16
    ksize, stride, padding, groups, m = 3, 1, 1, 1, 4

    root = jax.random.PRNGKey(0)
    k_wq, k_wk, k_wv, k_ea, k_eb, k_em, k_x = jax.random.split(root, 7)
    std = (2.0 / O) ** 0.5  # kaiming-normal(fan_out) for a 1x1 conv
    params = {
        "w_query": std * jax.random.normal(k_wq, (O, C), jnp.float32),
        "w_key": std * jax.random.normal(k_wk, (O, C), jnp.float32),
        "w_value": std * jax.random.normal(k_wv, (m, O, C), jnp.float32),
        "emb_a": jax.random.normal(k_ea, (O // groups, ksize), jnp.float32),
        "emb_b": jax.random.normal(k_eb, (O // groups, ksize), jnp.float32),
        "emb_mix": jax.random.normal(k_em, (m, O // groups), jnp.float32),
    }
    x = jax.random.normal(k_x, (B, C, H, W), jnp.float32)

    # Small tiles on purpose so the test exercises the pixel-tiled projection
    # grid and the halo-tiled / double-buffered attention path (grid = (2, 2)).
    out = attention_stem_forward(
        x, params, kernel_size=ksize, stride=stride, padding=padding,
        groups=groups, m=m, tile_h=8, tile_n=128)
    out = jax.block_until_ready(out)

    ref = reference_forward(
        x, params, kernel_size=ksize, stride=stride, padding=padding,
        groups=groups, m=m, proj_dtype=jnp.bfloat16)

    assert out.shape == (B, O, H, W), out.shape
    max_err = float(jnp.max(jnp.abs(out - ref)))
    assert jnp.allclose(out, ref, rtol=2e-2, atol=2e-2), f"max err {max_err}"
    print("KERNEL_OK")
</pallas_src>

<mosaic_0001>
module attributes {stable_mosaic.version = 11 : i64} {
  func.func @_proj_kernel(%arg0: i32, %arg1: memref<128x4xbf16, #tpu.memory_space<vmem>>, %arg2: memref<4x48xbf16, #tpu.memory_space<vmem>>, %arg3: memref<128x48xf32, #tpu.memory_space<vmem>>) attributes {dimension_semantics = [#tpu.dimension_semantics<parallel>], iteration_bounds = array<i64: 4>, scalar_prefetch = 0 : i64, scratch_operands = 0 : i64, tpu.core_type = #tpu.core_type<tc>, window_params = [{transform_indices = @transform_0, window_bounds = array<i64: 128, 4>}, {pipeline_mode = #tpu.pipeline_mode<synchronous>, transform_indices = @transform_1, window_bounds = array<i64: 4, 48>}, {transform_indices = @transform_2, window_bounds = array<i64: 128, 48>}]} {
    %c0 = arith.constant 0 : index
    %c0_0 = arith.constant 0 : index
    %0 = vector.load %arg1[%c0, %c0_0] : memref<128x4xbf16, #tpu.memory_space<vmem>>, vector<128x4xbf16>
    %c0_1 = arith.constant 0 : index
    %c0_2 = arith.constant 0 : index
    %1 = vector.load %arg2[%c0_1, %c0_2] : memref<4x48xbf16, #tpu.memory_space<vmem>>, vector<4x48xbf16>
    %cst = arith.constant dense<0.000000e+00> : vector<128x48xf32>
    %2 = tpu.matmul %0, %1, %cst {dimension_numbers = #tpu.dot_dimension_numbers<[1], [0], [0], [1], [0, 0, 1, 1], [], []>} : vector<128x4xbf16>, vector<4x48xbf16>, vector<128x48xf32> -> vector<128x48xf32>
    %c0_3 = arith.constant 0 : index
    %c0_4 = arith.constant 0 : index
    %3 = vector.load %arg3[%c0_3, %c0_4] : memref<128x48xf32, #tpu.memory_space<vmem>>, vector<128x48xf32>
    tpu.vector_store %arg3[%c0_3, %c0_4], %2 {strides = array<i32>} : memref<128x48xf32, #tpu.memory_space<vmem>>, vector<128x48xf32>,
    return
  }
  func.func @transform_0(%arg0: i32) -> (i32, i32) {
    %c0_i32 = arith.constant 0 : i32
    %c0_i32_0 = arith.constant 0 : i32
    return %arg0, %c0_i32 : i32, i32
  }
  func.func @transform_1(%arg0: i32) -> (i32, i32) {
    %c0_i32 = arith.constant 0 : i32
    %c0_i32_0 = arith.constant 0 : i32
    %c0_i32_1 = arith.constant 0 : i32
    return %c0_i32, %c0_i32_0 : i32, i32
  }
  func.func @transform_2(%arg0: i32) -> (i32, i32) {
    %c0_i32 = arith.constant 0 : i32
    %c0_i32_0 = arith.constant 0 : i32
    return %arg0, %c0_i32 : i32, i32
  }
}

</mosaic_0001>

<llo_original>
// kernel: tpu_custom_call.1
$region0: #{tpu_custom_call.1}
  #allocation0 [shape = 'u32[]', space=smem, size = 0x4, offset = 0x4, fixed_abs, tag = 'smem constant byte address 0x4 - core index']
  #allocation1 [shape = 'u32[144,128]{1,0:T(1,128)}', space=vmem, size = 0x12000, scoped, tag = 'internal scratch']
  %s0 = inlined_call_operand.vmem [shape: bf16[512,4], index: 0, kind: input, shape index: {}]
  %s1 = inlined_call_operand.vmem [shape: bf16[4,48], index: 1, kind: input, shape index: {}]
  %s2 = inlined_call_operand.vmem [shape: f32[512,48], index: 2, kind: output, shape index: {}]
  %s3 = sld [smem:[#allocation0]]
  $region41: #{tpu_custom_call.1} parent=0
    _
  %s5 = ssub.s32 1, %s3
  %s6 = scalar_select 0, %s5, %s3
  loop: start=0, step=1, limit=6
  $region2: #{tpu_custom_call.1} parent=0 // loop_pre_header
    _
  $region3: #{tpu_custom_call.1} parent=0 // loop_header
    %s8 = sphi 0, %s12
    %p9 = scmp.ge.s32.totalorder %s8, 6
    %s18 = sphi 0, %s20
    %s21 = sphi 0, %s18
    %s22 = sphi 0, %s21
    %s38 = sphi 0, %s22
    %s42 = sphi 0, %s42
    %s44 = sphi 0, %s42
    %s45 = sphi 0, %s44
    %s59 = sphi 0, %s45
    %s65 = sphi 0, %s67
    %s68 = sphi 0, %s65
    %s69 = sphi 0, %s68
    %s85 = sphi 0, %s69
  $region4: #{tpu_custom_call.1} parent=0 // loop_header_branch
    %11 = sbr.rel (%p9) target = $region8
  $region5: #{tpu_custom_call.1} parent=0 // loop_body
    %s13 = ssub.s32 %s8, 1
    %s14 = ssub.s32 %s8, 2
    %s15 = sadd.s32 %s8, 1
    %s16 = ssub.s32 %s8, %s15
    %p17 = scmp.eq.s32.totalorder %s16, 0
    %s19 = sadd.s32 %s18, 1
    %s20 = scalar_select %p17, %s18, %s19
    %p23 = pneg %p17
    %p24 = scmp.eq.s32.totalorder %s8, 3
    %p25 = por %p23, %p24
    %p26 = scmp.ne.s32.totalorder %s18, %s21
    %p27 = scmp.eq.s32.totalorder %s8, 0
    %p28 = por %p26, %p27
    %p29 = scmp.ne.s32.totalorder %s18, %s21
    %p30 = scmp.eq.s32.totalorder %s13, 3
    %p31 = por %p29, %p30
    %p32 = scmp.ne.s32.totalorder %s21, %s22
    %p33 = scmp.eq.s32.totalorder %s13, 0
    %p34 = por %p32, %p33
    %p35 = scmp.ne.s32.totalorder %s21, %s22
    %p36 = scmp.eq.s32.totalorder %s14, 3
    %p37 = por %p35, %p36
    %p39 = scmp.ne.s32.totalorder %s22, %s38
    %p40 = scmp.eq.s32.totalorder %s14, 0
    %p41 = por %p39, %p40
    %s43 = sadd.s32 %s42, 1
    %p46 = scmp.eq.s32.totalorder %s8, 3
    %p47 = scmp.ne.s32.totalorder %s42, %s44
    %p48 = scmp.eq.s32.totalorder %s8, 0
    %p49 = por %p47, %p48
    %p50 = scmp.ne.s32.totalorder %s42, %s44
    %p51 = scmp.eq.s32.totalorder %s13, 3
    %p52 = por %p50, %p51
    %p53 = scmp.ne.s32.totalorder %s44, %s45
    %p54 = scmp.eq.s32.totalorder %s13, 0
    %p55 = por %p53, %p54
    %p56 = scmp.ne.s32.totalorder %s44, %s45
    %p57 = scmp.eq.s32.totalorder %s14, 3
    %p58 = por %p56, %p57
    %p60 = scmp.ne.s32.totalorder %s45, %s59
    %p61 = scmp.eq.s32.totalorder %s14, 0
    %p62 = por %p60, %p61
    %s63 = ssub.s32 %s8, %s15
    %p64 = scmp.eq.s32.totalorder %s63, 0
    %s66 = sadd.s32 %s65, 1
    %s67 = scalar_select %p64, %s65, %s66
    %p70 = pneg %p64
    %p71 = scmp.eq.s32.totalorder %s8, 3
    %p72 = por %p70, %p71
    %p73 = scmp.ne.s32.totalorder %s65, %s68
    %p74 = scmp.eq.s32.totalorder %s8, 0
    %p75 = por %p73, %p74
    %p76 = scmp.ne.s32.totalorder %s65, %s68
    %p77 = scmp.eq.s32.totalorder %s13, 3
    %p78 = por %p76, %p77
    %p79 = scmp.ne.s32.totalorder %s68, %s69
    %p80 = scmp.eq.s32.totalorder %s13, 0
    %p81 = por %p79, %p80
    %p82 = scmp.ne.s32.totalorder %s68, %s69
    %p83 = scmp.eq.s32.totalorder %s14, 3
    %p84 = por %p82, %p83
    %p86 = scmp.ne.s32.totalorder %s69, %s85
    %p87 = scmp.eq.s32.totalorder %s14, 0
    %p88 = por %p86, %p87
    %p89 = scmp.le.s32.totalorder 1, %s8
    %p90 = scmp.lt.s32.totalorder %s8, 5
    %p91 = pnand %p89, %p90
    %p92 = pneg %p91
    // Predicated region
    $region9: #{tpu_custom_call.1} parent=5 // pred_check
      _
    $region10: #{tpu_custom_call.1} parent=5 // pred_check_branch
      %94 = sbr.rel (%p91) target = $region12
    $region11: #{tpu_custom_call.1} parent=5 // pred_region
      %s95 = ssub.s32 %s8, 1
      // Predicated region
      $region13: #{tpu_custom_call.1} parent=11 // pred_check
        %p96 = pneg %p55
      $region14: #{tpu_custom_call.1} parent=11 // pred_check_branch
        %98 = sbr.rel (%p96) target = $region16
      $region15: #{tpu_custom_call.1} parent=11 // pred_region
        _
      $region16: #{tpu_custom_call.1} parent=11 // pred_fallthru
        _
    $region12: #{tpu_custom_call.1} parent=5 // pred_fallthru
      _
    %p99 = scmp.lt.s32.totalorder %s8, 4
    // Predicated region
    $region17: #{tpu_custom_call.1} parent=5 // pred_check
      %p100 = pneg %p99
    $region18: #{tpu_custom_call.1} parent=5 // pred_check_branch
      %102 = sbr.rel (%p100) target = $region20
    $region19: #{tpu_custom_call.1} parent=5 // pred_region
      // Predicated region
      $region21: #{tpu_custom_call.1} parent=19 // pred_check
        %p103 = pneg %p28
      $region22: #{tpu_custom_call.1} parent=19 // pred_check_branch
        %105 = sbr.rel (%p103) target = $region24
      $region23: #{tpu_custom_call.1} parent=19 // pred_region
        %s106 = smul.u32 16, %s8
        %p107 = scmp.lt.s32.totalorder %s106, 63
        %s108 = scalar_select %p107, %s106, 63
        %s109 = smul.addr %s108, 4
        %s110 = scalar_lea.vmem %s0, %s109
        %s111 = smul.u32 16, %s8
      $region24: #{tpu_custom_call.1} parent=19 // pred_fallthru
        _
    $region20: #{tpu_custom_call.1} parent=5 // pred_fallthru
      _
    %p112 = scmp.le.s32.totalorder 1, %s8
    %p113 = scmp.lt.s32.totalorder %s8, 5
    %p114 = pnand %p112, %p113
    %p115 = pneg %p114
    // Predicated region
    $region25: #{tpu_custom_call.1} parent=5 // pred_check
      _
    $region26: #{tpu_custom_call.1} parent=5 // pred_check_branch
      %117 = sbr.rel (%p114) target = $region28
    $region27: #{tpu_custom_call.1} parent=5 // pred_region
      %s118 = ssub.s32 %s8, 1
      %s119 = smul.u32 16, %s13
      %p120 = scmp.lt.s32.totalorder %s119, 63
      %s121 = scalar_select %p120, %s119, 63
      %s122 = smul.addr %s121, 4
      %s123 = scalar_lea.vmem %s0, %s122
      %p124 = pneg %p34
      %p125 = pneg %p31
      %p126 = pneg %p55
      %p127 = pneg %p52
      %p128 = pneg %p81
      %p129 = pneg %p78
      %s130 = smul.u32 16, %s13
      %p131 = scmp.lt.s32.totalorder %s130, 63
      %s132 = scalar_select %p131, %s130, 63
      %s133 = smul.addr %s132, 8
      %s134 = scalar_lea.vmem %s2, %s133
      %s135 = smul.u32 16, %s13
      %p136 = scmp.lt.s32.totalorder %s135, 63
      %s137 = scalar_select %p136, %s135, 63
      %s138 = smul.addr %s137, 4
      %s139 = scalar_lea.vmem %s0, %s138
      %s140 = smul.u32 16, %s13
      %s141 = smul.u32 16, %s13
      %p142 = scmp.lt.s32.totalorder %s141, 63
      %s143 = scalar_select %p142, %s141, 63
      %s144 = smul.addr %s143, 8
      %s145 = scalar_lea.vmem %s2, %s144
      %s146 = smul.u32 16, %s13
      %v148 = vld [vmem:[%s139] sm:$0xf]
      %v149 = vld [vmem:[%s139 + $0x4] sm:$0xf]
      %v150 = vld [vmem:[%s139 + $0x8] sm:$0xf]
      %v151 = vld [vmem:[%s139 + $0xc] sm:$0xf]
      %v152 = vld [vmem:[%s139 + $0x10] sm:$0xf]
      %v153 = vld [vmem:[%s139 + $0x14] sm:$0xf]
      %v154 = vld [vmem:[%s139 + $0x18] sm:$0xf]
      %v155 = vld [vmem:[%s139 + $0x1c] sm:$0xf]
      %v156 = vld [vmem:[%s139 + $0x20] sm:$0xf]
      %v157 = vld [vmem:[%s139 + $0x24] sm:$0xf]
      %v158 = vld [vmem:[%s139 + $0x28] sm:$0xf]
      %v159 = vld [vmem:[%s139 + $0x2c] sm:$0xf]
      %v160 = vld [vmem:[%s139 + $0x30] sm:$0xf]
      %v161 = vld [vmem:[%s139 + $0x34] sm:$0xf]
      %v162 = vld [vmem:[%s139 + $0x38] sm:$0xf]
      %v163 = vld [vmem:[%s139 + $0x3c] sm:$0xf]
      %v164 = vld [vmem:[%s1] sm:$0x3]
      %v181 = vunpack.c.l.b16 %v148
      %v182 = vunpack.c.l.b16 %v149
      %v183 = vunpack.c.l.b16 %v150
      %v184 = vunpack.c.l.b16 %v151
      %v185 = vunpack.c.l.b16 %v152
      %v186 = vunpack.c.l.b16 %v153
      %v187 = vunpack.c.l.b16 %v154
      %v188 = vunpack.c.l.b16 %v155
      %v189 = vunpack.c.l.b16 %v156
      %v190 = vunpack.c.l.b16 %v157
      %v191 = vunpack.c.l.b16 %v158
      %v192 = vunpack.c.l.b16 %v159
      %v193 = vunpack.c.l.b16 %v160
      %v194 = vunpack.c.l.b16 %v161
      %v195 = vunpack.c.l.b16 %v162
      %v196 = vunpack.c.l.b16 %v163
      %v197 = vpack.c.b16 %v182, %v181
      %v198 = vpack.c.b16 %v184, %v183
      %v199 = vpack.c.b16 %v186, %v185
      %v200 = vpack.c.b16 %v188, %v187
      %v201 = vpack.c.b16 %v190, %v189
      %v202 = vpack.c.b16 %v192, %v191
      %v203 = vpack.c.b16 %v194, %v193
      %v204 = vpack.c.b16 %v196, %v195
      %vm205 = vcmask 31744
      %v207 = vsel %vm205, %v197, 0
      %v210 = vsel %vm205, %v198, 0
      %v213 = vsel %vm205, %v199, 0
      %v216 = vsel %vm205, %v200, 0
      %v219 = vsel %vm205, %v201, 0
      %v222 = vsel %vm205, %v202, 0
      %v225 = vsel %vm205, %v203, 0
      %v228 = vsel %vm205, %v204, 0
      %vm230 = vcmask 1041408
      %v232 = vsel %vm230, %v164, 0
      %234 = vmatprep.subr.bf16.mxu0 0
      %235 = vmatpush1.bf16.msra.mxu0 0
      %236 = vmatprep.subr.bf16.mxu0 0
      %237 = vmatpush1.bf16.msra.mxu0 0
      %238 = vmatprep.subr.bf16.mxu0 0
      %239 = vmatpush1.bf16.msra.mxu0 0
      %240 = vmatprep.subr.bf16.mxu0 0
      %241 = vmatpush1.bf16.msra.mxu0 0
      %242 = vmatprep.subr.bf16.mxu0 0
      %243 = vmatpush1.bf16.msra.mxu0 0
      %244 = vmatprep.subr.bf16.mxu0 0
      %245 = vmatpush1.bf16.msra.mxu0 0
      %246 = vmatprep.subr.bf16.mxu0 0
      %247 = vmatpush1.bf16.msra.mxu0 0
      %248 = vmatprep.subr.bf16.mxu0 0
      %249 = vmatpush1.bf16.msra.mxu0 %v232
      %250 = vmatprep.subr.bf16.mxu0 0
      %251 = vmatpush2.bf16.msra.mxu0 0
      %252 = vmatprep.subr.bf16.mxu0 0
      %253 = vmatpush2.bf16.msra.mxu0 0
      %254 = vmatprep.subr.bf16.mxu0 0
      %255 = vmatpush2.bf16.msra.mxu0 0
      %256 = vmatprep.subr.bf16.mxu0 0
      %257 = vmatpush2.bf16.msra.mxu0 0
      %258 = vmatprep.subr.bf16.mxu0 0
      %259 = vmatpush2.bf16.msra.mxu0 0
      %260 = vmatprep.subr.bf16.mxu0 0
      %261 = vmatpush2.bf16.msra.mxu0 0
      %262 = vmatprep.subr.bf16.mxu0 0
      %263 = vmatpush2.bf16.msra.mxu0 0
      %264 = vmatprep.subr.bf16.mxu0 0
      %265 = vmatpush2.bf16.msra.mxu0 0
      %266 = vmatprep.mubr.bf16.mxu0 0
      %267 = vmatmul.mubr.bf16.gmra.mxu0 %v207
      %v268 = vpop.f32.mrf.mxu0
      %v269 = vadd.f32 0.0, %v268
      %v270 = vpop.f32.mrf.mxu0
      %v271 = vpop.f32.mrf.mxu0
      %v272 = vadd.f32 0.0, %v271
      %v273 = vpop.f32.mrf.mxu0
      %274 = vmatprep.mubr.bf16.mxu0 0
      %275 = vmatmul.mubr.bf16.gmra.mxu0 %v210
      %v276 = vpop.f32.mrf.mxu0
      %v277 = vadd.f32 0.0, %v276
      %v278 = vpop.f32.mrf.mxu0
      %v279 = vpop.f32.mrf.mxu0
      %v280 = vadd.f32 0.0, %v279
      %v281 = vpop.f32.mrf.mxu0
      %282 = vmatprep.mubr.bf16.mxu0 0
      %283 = vmatmul.mubr.bf16.gmra.mxu0 %v213
      %v284 = vpop.f32.mrf.mxu0
      %v285 = vadd.f32 0.0, %v284
      %v286 = vpop.f32.mrf.mxu0
      %v287 = vpop.f32.mrf.mxu0
      %v288 = vadd.f32 0.0, %v287
      %v289 = vpop.f32.mrf.mxu0
      %290 = vmatprep.mubr.bf16.mxu0 0
      %291 = vmatmul.mubr.bf16.gmra.mxu0 %v216
      %v292 = vpop.f32.mrf.mxu0
      %v293 = vadd.f32 0.0, %v292
      %v294 = vpop.f32.mrf.mxu0
      %v295 = vpop.f32.mrf.mxu0
      %v296 = vadd.f32 0.0, %v295
      %v297 = vpop.f32.mrf.mxu0
      %298 = vmatprep.mubr.bf16.mxu0 0
      %299 = vmatmul.mubr.bf16.gmra.mxu0 %v219
      %v300 = vpop.f32.mrf.mxu0
      %v301 = vadd.f32 0.0, %v300
      %v302 = vpop.f32.mrf.mxu0
      %v303 = vpop.f32.mrf.mxu0
      %v304 = vadd.f32 0.0, %v303
      %v305 = vpop.f32.mrf.mxu0
      %306 = vmatprep.mubr.bf16.mxu0 0
      %307 = vmatmul.mubr.bf16.gmra.mxu0 %v222
      %v308 = vpop.f32.mrf.mxu0
      %v309 = vadd.f32 0.0, %v308
      %v310 = vpop.f32.mrf.mxu0
      %v311 = vpop.f32.mrf.mxu0
      %v312 = vadd.f32 0.0, %v311
      %v313 = vpop.f32.mrf.mxu0
      %314 = vmatprep.mubr.bf16.mxu0 0
      %315 = vmatmul.mubr.bf16.gmra.mxu0 %v225
      %v316 = vpop.f32.mrf.mxu0
      %v317 = vadd.f32 0.0, %v316
      %v318 = vpop.f32.mrf.mxu0
      %v319 = vpop.f32.mrf.mxu0
      %v320 = vadd.f32 0.0, %v319
      %v321 = vpop.f32.mrf.mxu0
      %322 = vmatprep.mubr.bf16.mxu0 0
      %323 = vmatmul.mubr.bf16.gmra.mxu0 %v228
      %v324 = vpop.f32.mrf.mxu0
      %v325 = vadd.f32 0.0, %v324
      %v326 = vpop.f32.mrf.mxu0
      %v327 = vpop.f32.mrf.mxu0
      %v328 = vadd.f32 0.0, %v327
      %v329 = vpop.f32.mrf.mxu0
      %330 = vdwg.mxu0
      %vm331 = vcmask 392192
      %332 = vst.msk [vmem:[%s145] sm:$0xff] %vm331, %v269
      %333 = vst.msk [vmem:[%s145 + $0x8] sm:$0xff] %vm331, %v272
      %334 = vst.msk [vmem:[%s145 + $0x10] sm:$0xff] %vm331, %v277
      %335 = vst.msk [vmem:[%s145 + $0x18] sm:$0xff] %vm331, %v280
      %336 = vst.msk [vmem:[%s145 + $0x20] sm:$0xff] %vm331, %v285
      %337 = vst.msk [vmem:[%s145 + $0x28] sm:$0xff] %vm331, %v288
      %338 = vst.msk [vmem:[%s145 + $0x30] sm:$0xff] %vm331, %v293
      %339 = vst.msk [vmem:[%s145 + $0x38] sm:$0xff] %vm331, %v296
      %340 = vst.msk [vmem:[%s145 + $0x40] sm:$0xff] %vm331, %v301
      %341 = vst.msk [vmem:[%s145 + $0x48] sm:$0xff] %vm331, %v304
      %342 = vst.msk [vmem:[%s145 + $0x50] sm:$0xff] %vm331, %v309
      %343 = vst.msk [vmem:[%s145 + $0x58] sm:$0xff] %vm331, %v312
      %344 = vst.msk [vmem:[%s145 + $0x60] sm:$0xff] %vm331, %v317
      %345 = vst.msk [vmem:[%s145 + $0x68] sm:$0xff] %vm331, %v320
      %346 = vst.msk [vmem:[%s145 + $0x70] sm:$0xff] %vm331, %v325
      %347 = vst.msk [vmem:[%s145 + $0x78] sm:$0xff] %vm331, %v328
      %s348 = smul.u32 16, %s13
      %p349 = scmp.lt.s32.totalorder %s348, 63
      %s350 = scalar_select %p349, %s348, 63
      %s351 = smul.addr %s350, 8
      %s352 = scalar_lea.vmem %s2, %s351
      // Predicated region
      $region29: #{tpu_custom_call.1} parent=27 // pred_check
        %p353 = pneg %p78
      $region30: #{tpu_custom_call.1} parent=27 // pred_check_branch
        %355 = sbr.rel (%p353) target = $region32
      $region31: #{tpu_custom_call.1} parent=27 // pred_region
        %s356 = smul.u32 16, %s13
      $region32: #{tpu_custom_call.1} parent=27 // pred_fallthru
        _
    $region28: #{tpu_custom_call.1} parent=5 // pred_fallthru
      _
    %p357 = scmp.le.s32.totalorder 2, %s8
    // Predicated region
    $region33: #{tpu_custom_call.1} parent=5 // pred_check
      %p358 = pneg %p357
    $region34: #{tpu_custom_call.1} parent=5 // pred_check_branch
      %360 = sbr.rel (%p358) target = $region36
    $region35: #{tpu_custom_call.1} parent=5 // pred_region
      %s361 = ssub.s32 %s8, 2
      // Predicated region
      $region37: #{tpu_custom_call.1} parent=35 // pred_check
        %p362 = pneg %p84
      $region38: #{tpu_custom_call.1} parent=35 // pred_check_branch
        %364 = sbr.rel (%p362) target = $region40
      $region39: #{tpu_custom_call.1} parent=35 // pred_region
        %s365 = smul.u32 16, %s14
        %p366 = scmp.lt.s32.totalorder %s365, 63
        %s367 = scalar_select %p366, %s365, 63
        %s368 = smul.addr %s367, 8
        %s369 = scalar_lea.vmem %s2, %s368
      $region40: #{tpu_custom_call.1} parent=35 // pred_fallthru
        _
    $region36: #{tpu_custom_call.1} parent=5 // pred_fallthru
      _
  $region6: #{tpu_custom_call.1} parent=0 // loop_footer
    %s12 = sadd.s32 1, %s8
  $region7: #{tpu_custom_call.1} parent=0 // loop_footer_branch
    %7 = sbr.rel target = $region3
  $region8: #{tpu_custom_call.1} parent=0 // loop_exit
    _

</llo_original>
